<compile_context>
chip_gen: v5e
topology: v5e:2x2
jax: 0.10.0
libtpu: 0.0.40
codegen_flags: <defaults>
</compile_context>

<pallas_src>
import functools

import jax
import jax.numpy as jnp
from jax.experimental import pallas as pl
from jax.experimental.pallas import tpu as pltpu

HIDDEN = 25
IN_FEATS = 2
OUT_FEATS = 2
N_RES_BLOCKS = 3
H_PAD = 32      # hidden padded to a sublane multiple (25 -> 32), NOT to 128 lanes
TILE_B = 512    # default batch tile on the lane axis; multiple of 128


# ----------------------------- Pallas kernel ---------------------------------
def residual_dnn_kernel(x_ref, w0_ref, b0_ref, wres_ref, bres_ref, wl_ref, bl_ref,
                        o_ref, *, n_blocks):
    # Transposed layout: all activations are (features, batch_tile); batch on lanes.
    # fc_first: h = W0^T @ x^T + b0   (f32; K=2 so MXU cost is negligible)
    h = jnp.dot(w0_ref[...], x_ref[...],
                preferred_element_type=jnp.float32) + b0_ref[...]

    # residual blocks (static unroll; n_blocks is a small compile-time constant)
    for r in range(n_blocks):
        t = jnp.tanh(h).astype(jnp.bfloat16)        # f32 tanh (v5e-safe), bf16 into MXU
        t = jnp.dot(wres_ref[r, 0], t,
                    preferred_element_type=jnp.float32) + bres_ref[r, 0]
        t = jnp.tanh(t).astype(jnp.bfloat16)
        t = jnp.dot(wres_ref[r, 1], t,
                    preferred_element_type=jnp.float32) + bres_ref[r, 1]
        h = h + t                                   # residual carry stays f32

    # act_last + fc_last (f32; M=2, trivial)
    h = jnp.tanh(h)
    o_ref[...] = (jnp.dot(wl_ref[...], h, preferred_element_type=jnp.float32)
                  + bl_ref[...]).astype(o_ref.dtype)


# ------------------------------- wrapper --------------------------------------
def _pad_to(a, shape, dtype=jnp.float32):
    out = jnp.zeros(shape, dtype)
    return out.at[tuple(slice(0, s) for s in a.shape)].set(a.astype(dtype))


def residual_dnn_forward(x, params, *, tile_b=TILE_B):
    """x: (N, IN_FEATS) float32 -> (N, OUT_FEATS) float32."""
    n = x.shape[0]
    n_pad = ((n + tile_b - 1) // tile_b) * tile_b
    R = params["w1s"].shape[0]

    # Batch-only pad, then present as (features, batch): features on sublanes,
    # batch on lanes.  Zero padding is exact: tanh(0)=0 and padded weight
    # rows/cols and biases are zero, so padded hidden rows stay identically 0;
    # padded batch columns are computed then discarded.
    xt = jnp.pad(x.astype(jnp.float32), ((0, n_pad - n), (0, 0))).T   # (IN_FEATS, n_pad)

    w0 = _pad_to(params["w0"].T, (H_PAD, IN_FEATS))                          # (32, 2) f32
    b0 = _pad_to(params["b0"][:, None], (H_PAD, 1))                          # (32, 1) f32
    # Stack both per-block linears into one grid-invariant weight / bias array.
    w1t = jnp.swapaxes(params["w1s"], 1, 2)                                  # (R, h, h) = W1^T
    w2t = jnp.swapaxes(params["w2s"], 1, 2)                                  # (R, h, h) = W2^T
    wres = _pad_to(jnp.stack([w1t, w2t], axis=1),
                   (R, 2, H_PAD, H_PAD), jnp.bfloat16)                       # (R,2,32,32) bf16
    bres = _pad_to(jnp.stack([params["b1s"], params["b2s"]], axis=1)[..., None],
                   (R, 2, H_PAD, 1))                                         # (R,2,32,1) f32
    wl = _pad_to(params["wl"].T, (OUT_FEATS, H_PAD))                         # (2, 32) f32
    bl = params["bl"][:, None].astype(jnp.float32)                           # (2, 1)  f32

    grid = (n_pad // tile_b,)
    kernel = functools.partial(residual_dnn_kernel, n_blocks=R)

    out_t = pl.pallas_call(
        kernel,
        out_shape=jax.ShapeDtypeStruct((OUT_FEATS, n_pad), jnp.float32),
        grid_spec=pltpu.PrefetchScalarGridSpec(
            num_scalar_prefetch=0,
            grid=grid,
            in_specs=[
                pl.BlockSpec((IN_FEATS, tile_b), lambda i: (0, i)),      # x^T tile
                pl.BlockSpec((H_PAD, IN_FEATS), lambda i: (0, 0)),       # W0^T
                pl.BlockSpec((H_PAD, 1), lambda i: (0, 0)),              # b0
                pl.BlockSpec((R, 2, H_PAD, H_PAD), lambda i: (0, 0, 0, 0)),  # residual W^T stack
                pl.BlockSpec((R, 2, H_PAD, 1), lambda i: (0, 0, 0, 0)),      # residual bias stack
                pl.BlockSpec((OUT_FEATS, H_PAD), lambda i: (0, 0)),      # Wl^T
                pl.BlockSpec((OUT_FEATS, 1), lambda i: (0, 0)),          # bl
            ],
            out_specs=pl.BlockSpec((OUT_FEATS, tile_b), lambda i: (0, i)),
        ),
        compiler_params=pltpu.CompilerParams(
            dimension_semantics=("parallel",)),
    )(xt, w0, b0, wres, bres, wl, bl)

    return out_t[:, :n].T   # (N, OUT_FEATS)


# ------------------------- parameter initialization ---------------------------
def init_params(key, in_f=IN_FEATS, hidden=HIDDEN, out_f=OUT_FEATS, n_blocks=N_RES_BLOCKS):
    """Deterministic init mirroring the PyTorch module:
    Kaiming-normal weights (std = sqrt(2/fan_in)), PyTorch-default uniform biases.
    Weights are stored (in_features, out_features) == PyTorch weight.T, so y = x @ W + b."""
    def kaiming(k, fan_in, fan_out):
        return jax.random.normal(k, (fan_in, fan_out), jnp.float32) * jnp.sqrt(2.0 / fan_in)

    def bias(k, fan_in, fan_out):
        bound = 1.0 / jnp.sqrt(fan_in)
        return jax.random.uniform(k, (fan_out,), jnp.float32, -bound, bound)

    keys = jax.random.split(key, 4 + 4 * n_blocks)
    ki = iter(keys)
    p = {
        "w0": kaiming(next(ki), in_f, hidden),
        "b0": bias(next(ki), in_f, hidden),
        "w1s": jnp.stack([kaiming(next(ki), hidden, hidden) for _ in range(n_blocks)]),
        "b1s": jnp.stack([bias(next(ki), hidden, hidden) for _ in range(n_blocks)]),
    }
    p["w2s"] = jnp.stack([kaiming(next(ki), hidden, hidden) for _ in range(n_blocks)])
    p["b2s"] = jnp.stack([bias(next(ki), hidden, hidden) for _ in range(n_blocks)])
    p["wl"] = kaiming(next(ki), hidden, out_f)
    p["bl"] = bias(next(ki), hidden, out_f)
    return p


# ---------------------------- pure-JAX reference -------------------------------
def residual_dnn_ref(x, params):
    h = x @ params["w0"] + params["b0"]
    R = params["w1s"].shape[0]
    for r in range(R):
        t = jnp.tanh(h)
        t = t @ params["w1s"][r] + params["b1s"][r]
        t = jnp.tanh(t)
        t = t @ params["w2s"][r] + params["b2s"][r]
        h = h + t
    h = jnp.tanh(h)
    return h @ params["wl"] + params["bl"]


if __name__ == "__main__":
    key = jax.random.PRNGKey(0)
    k_param, k_x = jax.random.split(key)

    params = init_params(k_param)
    # Small demo batch; tile_b=128 gives a 2-step grid (keeps both v7x TCs busy).
    x = jax.random.normal(k_x, (256, IN_FEATS), jnp.float32)

    out = residual_dnn_forward(x, params, tile_b=128)
    out = jax.block_until_ready(out)

    ref = residual_dnn_ref(x, params)
    assert out.shape == (256, OUT_FEATS)
    # bf16 hidden-layer matmuls introduce ~1e-3..1e-2 absolute deviation vs the f32 reference.
    assert jnp.allclose(out, ref, atol=3e-2, rtol=3e-2), "Pallas output mismatch vs reference"

    print("KERNEL_OK")
</pallas_src>

<mosaic_0001>
module attributes {stable_mosaic.version = 11 : i64} {
  func.func @residual_dnn_kernel(%arg0: i32, %arg1: memref<2x128xf32, #tpu.memory_space<vmem>>, %arg2: memref<32x2xf32, #tpu.memory_space<vmem>>, %arg3: memref<32x1xf32, #tpu.memory_space<vmem>>, %arg4: memref<3x2x32x32xbf16, #tpu.memory_space<vmem>>, %arg5: memref<3x2x32x1xf32, #tpu.memory_space<vmem>>, %arg6: memref<2x32xf32, #tpu.memory_space<vmem>>, %arg7: memref<2x1xf32, #tpu.memory_space<vmem>>, %arg8: memref<2x128xf32, #tpu.memory_space<vmem>>) attributes {dimension_semantics = [#tpu.dimension_semantics<parallel>], iteration_bounds = array<i64: 2>, scalar_prefetch = 0 : i64, scratch_operands = 0 : i64, tpu.core_type = #tpu.core_type<tc>, window_params = [{transform_indices = @transform_0, window_bounds = array<i64: 2, 128>}, {pipeline_mode = #tpu.pipeline_mode<synchronous>, transform_indices = @transform_1, window_bounds = array<i64: 32, 2>}, {pipeline_mode = #tpu.pipeline_mode<synchronous>, transform_indices = @transform_2, window_bounds = array<i64: 32, 1>}, {pipeline_mode = #tpu.pipeline_mode<synchronous>, transform_indices = @transform_3, window_bounds = array<i64: 3, 2, 32, 32>}, {pipeline_mode = #tpu.pipeline_mode<synchronous>, transform_indices = @transform_4, window_bounds = array<i64: 3, 2, 32, 1>}, {pipeline_mode = #tpu.pipeline_mode<synchronous>, transform_indices = @transform_5, window_bounds = array<i64: 2, 32>}, {pipeline_mode = #tpu.pipeline_mode<synchronous>, transform_indices = @transform_6, window_bounds = array<i64: 2, 1>}, {transform_indices = @transform_7, window_bounds = array<i64: 2, 128>}]} {
    %c0 = arith.constant 0 : index
    %c0_0 = arith.constant 0 : index
    %0 = vector.load %arg2[%c0, %c0_0] : memref<32x2xf32, #tpu.memory_space<vmem>>, vector<32x2xf32>
    %c0_1 = arith.constant 0 : index
    %c0_2 = arith.constant 0 : index
    %1 = vector.load %arg1[%c0_1, %c0_2] : memref<2x128xf32, #tpu.memory_space<vmem>>, vector<2x128xf32>
    %cst = arith.constant dense<0.000000e+00> : vector<32x128xf32>
    %2 = tpu.matmul %0, %1, %cst {dimension_numbers = #tpu.dot_dimension_numbers<[1], [0], [0], [1], [0, 0, 1, 1], [], []>} : vector<32x2xf32>, vector<2x128xf32>, vector<32x128xf32> -> vector<32x128xf32>
    %c0_3 = arith.constant 0 : index
    %c0_4 = arith.constant 0 : index
    %3 = vector.load %arg3[%c0_3, %c0_4] : memref<32x1xf32, #tpu.memory_space<vmem>>, vector<32x1xf32>
    %4 = vector.broadcast %3 : vector<32x1xf32> to vector<32x128xf32>
    %5 = arith.addf %2, %4 : vector<32x128xf32>
    %6 = math.tanh %5 : vector<32x128xf32>
    %7 = arith.truncf %6 : vector<32x128xf32> to vector<32x128xbf16>
    %c0_5 = arith.constant 0 : index
    %c0_6 = arith.constant 0 : index
    %c0_7 = arith.constant 0 : index
    %c0_8 = arith.constant 0 : index
    %8 = vector.load %arg4[%c0_5, %c0_6, %c0_7, %c0_8] : memref<3x2x32x32xbf16, #tpu.memory_space<vmem>>, vector<1x1x32x32xbf16>
    %9 = vector.shape_cast %8 : vector<1x1x32x32xbf16> to vector<32x32xbf16>
    %cst_9 = arith.constant dense<0.000000e+00> : vector<32x128xf32>
    %10 = tpu.matmul %9, %7, %cst_9 {dimension_numbers = #tpu.dot_dimension_numbers<[1], [0], [0], [1], [0, 0, 1, 1], [], []>} : vector<32x32xbf16>, vector<32x128xbf16>, vector<32x128xf32> -> vector<32x128xf32>
    %c0_10 = arith.constant 0 : index
    %c0_11 = arith.constant 0 : index
    %c0_12 = arith.constant 0 : index
    %c0_13 = arith.constant 0 : index
    %11 = vector.load %arg5[%c0_10, %c0_11, %c0_12, %c0_13] : memref<3x2x32x1xf32, #tpu.memory_space<vmem>>, vector<1x1x32x1xf32>
    %12 = vector.shape_cast %11 : vector<1x1x32x1xf32> to vector<32x1xf32>
    %13 = vector.broadcast %12 : vector<32x1xf32> to vector<32x128xf32>
    %14 = arith.addf %10, %13 : vector<32x128xf32>
    %15 = math.tanh %14 : vector<32x128xf32>
    %16 = arith.truncf %15 : vector<32x128xf32> to vector<32x128xbf16>
    %c0_14 = arith.constant 0 : index
    %c1 = arith.constant 1 : index
    %c0_15 = arith.constant 0 : index
    %c0_16 = arith.constant 0 : index
    %17 = vector.load %arg4[%c0_14, %c1, %c0_15, %c0_16] : memref<3x2x32x32xbf16, #tpu.memory_space<vmem>>, vector<1x1x32x32xbf16>
    %18 = vector.shape_cast %17 : vector<1x1x32x32xbf16> to vector<32x32xbf16>
    %cst_17 = arith.constant dense<0.000000e+00> : vector<32x128xf32>
    %19 = tpu.matmul %18, %16, %cst_17 {dimension_numbers = #tpu.dot_dimension_numbers<[1], [0], [0], [1], [0, 0, 1, 1], [], []>} : vector<32x32xbf16>, vector<32x128xbf16>, vector<32x128xf32> -> vector<32x128xf32>
    %c0_18 = arith.constant 0 : index
    %c1_19 = arith.constant 1 : index
    %c0_20 = arith.constant 0 : index
    %c0_21 = arith.constant 0 : index
    %20 = vector.load %arg5[%c0_18, %c1_19, %c0_20, %c0_21] : memref<3x2x32x1xf32, #tpu.memory_space<vmem>>, vector<1x1x32x1xf32>
    %21 = vector.shape_cast %20 : vector<1x1x32x1xf32> to vector<32x1xf32>
    %22 = vector.broadcast %21 : vector<32x1xf32> to vector<32x128xf32>
    %23 = arith.addf %19, %22 : vector<32x128xf32>
    %24 = arith.addf %5, %23 : vector<32x128xf32>
    %25 = math.tanh %24 : vector<32x128xf32>
    %26 = arith.truncf %25 : vector<32x128xf32> to vector<32x128xbf16>
    %c1_22 = arith.constant 1 : index
    %c0_23 = arith.constant 0 : index
    %c0_24 = arith.constant 0 : index
    %c0_25 = arith.constant 0 : index
    %27 = vector.load %arg4[%c1_22, %c0_23, %c0_24, %c0_25] : memref<3x2x32x32xbf16, #tpu.memory_space<vmem>>, vector<1x1x32x32xbf16>
    %28 = vector.shape_cast %27 : vector<1x1x32x32xbf16> to vector<32x32xbf16>
    %cst_26 = arith.constant dense<0.000000e+00> : vector<32x128xf32>
    %29 = tpu.matmul %28, %26, %cst_26 {dimension_numbers = #tpu.dot_dimension_numbers<[1], [0], [0], [1], [0, 0, 1, 1], [], []>} : vector<32x32xbf16>, vector<32x128xbf16>, vector<32x128xf32> -> vector<32x128xf32>
    %c1_27 = arith.constant 1 : index
    %c0_28 = arith.constant 0 : index
    %c0_29 = arith.constant 0 : index
    %c0_30 = arith.constant 0 : index
    %30 = vector.load %arg5[%c1_27, %c0_28, %c0_29, %c0_30] : memref<3x2x32x1xf32, #tpu.memory_space<vmem>>, vector<1x1x32x1xf32>
    %31 = vector.shape_cast %30 : vector<1x1x32x1xf32> to vector<32x1xf32>
    %32 = vector.broadcast %31 : vector<32x1xf32> to vector<32x128xf32>
    %33 = arith.addf %29, %32 : vector<32x128xf32>
    %34 = math.tanh %33 : vector<32x128xf32>
    %35 = arith.truncf %34 : vector<32x128xf32> to vector<32x128xbf16>
    %c1_31 = arith.constant 1 : index
    %c1_32 = arith.constant 1 : index
    %c0_33 = arith.constant 0 : index
    %c0_34 = arith.constant 0 : index
    %36 = vector.load %arg4[%c1_31, %c1_32, %c0_33, %c0_34] : memref<3x2x32x32xbf16, #tpu.memory_space<vmem>>, vector<1x1x32x32xbf16>
    %37 = vector.shape_cast %36 : vector<1x1x32x32xbf16> to vector<32x32xbf16>
    %cst_35 = arith.constant dense<0.000000e+00> : vector<32x128xf32>
    %38 = tpu.matmul %37, %35, %cst_35 {dimension_numbers = #tpu.dot_dimension_numbers<[1], [0], [0], [1], [0, 0, 1, 1], [], []>} : vector<32x32xbf16>, vector<32x128xbf16>, vector<32x128xf32> -> vector<32x128xf32>
    %c1_36 = arith.constant 1 : index
    %c1_37 = arith.constant 1 : index
    %c0_38 = arith.constant 0 : index
    %c0_39 = arith.constant 0 : index
    %39 = vector.load %arg5[%c1_36, %c1_37, %c0_38, %c0_39] : memref<3x2x32x1xf32, #tpu.memory_space<vmem>>, vector<1x1x32x1xf32>
    %40 = vector.shape_cast %39 : vector<1x1x32x1xf32> to vector<32x1xf32>
    %41 = vector.broadcast %40 : vector<32x1xf32> to vector<32x128xf32>
    %42 = arith.addf %38, %41 : vector<32x128xf32>
    %43 = arith.addf %24, %42 : vector<32x128xf32>
    %44 = math.tanh %43 : vector<32x128xf32>
    %45 = arith.truncf %44 : vector<32x128xf32> to vector<32x128xbf16>
    %c2 = arith.constant 2 : index
    %c0_40 = arith.constant 0 : index
    %c0_41 = arith.constant 0 : index
    %c0_42 = arith.constant 0 : index
    %46 = vector.load %arg4[%c2, %c0_40, %c0_41, %c0_42] : memref<3x2x32x32xbf16, #tpu.memory_space<vmem>>, vector<1x1x32x32xbf16>
    %47 = vector.shape_cast %46 : vector<1x1x32x32xbf16> to vector<32x32xbf16>
    %cst_43 = arith.constant dense<0.000000e+00> : vector<32x128xf32>
    %48 = tpu.matmul %47, %45, %cst_43 {dimension_numbers = #tpu.dot_dimension_numbers<[1], [0], [0], [1], [0, 0, 1, 1], [], []>} : vector<32x32xbf16>, vector<32x128xbf16>, vector<32x128xf32> -> vector<32x128xf32>
    %c2_44 = arith.constant 2 : index
    %c0_45 = arith.constant 0 : index
    %c0_46 = arith.constant 0 : index
    %c0_47 = arith.constant 0 : index
    %49 = vector.load %arg5[%c2_44, %c0_45, %c0_46, %c0_47] : memref<3x2x32x1xf32, #tpu.memory_space<vmem>>, vector<1x1x32x1xf32>
    %50 = vector.shape_cast %49 : vector<1x1x32x1xf32> to vector<32x1xf32>
    %51 = vector.broadcast %50 : vector<32x1xf32> to vector<32x128xf32>
    %52 = arith.addf %48, %51 : vector<32x128xf32>
    %53 = math.tanh %52 : vector<32x128xf32>
    %54 = arith.truncf %53 : vector<32x128xf32> to vector<32x128xbf16>
    %c2_48 = arith.constant 2 : index
    %c1_49 = arith.constant 1 : index
    %c0_50 = arith.constant 0 : index
    %c0_51 = arith.constant 0 : index
    %55 = vector.load %arg4[%c2_48, %c1_49, %c0_50, %c0_51] : memref<3x2x32x32xbf16, #tpu.memory_space<vmem>>, vector<1x1x32x32xbf16>
    %56 = vector.shape_cast %55 : vector<1x1x32x32xbf16> to vector<32x32xbf16>
    %cst_52 = arith.constant dense<0.000000e+00> : vector<32x128xf32>
    %57 = tpu.matmul %56, %54, %cst_52 {dimension_numbers = #tpu.dot_dimension_numbers<[1], [0], [0], [1], [0, 0, 1, 1], [], []>} : vector<32x32xbf16>, vector<32x128xbf16>, vector<32x128xf32> -> vector<32x128xf32>
    %c2_53 = arith.constant 2 : index
    %c1_54 = arith.constant 1 : index
    %c0_55 = arith.constant 0 : index
    %c0_56 = arith.constant 0 : index
    %58 = vector.load %arg5[%c2_53, %c1_54, %c0_55, %c0_56] : memref<3x2x32x1xf32, #tpu.memory_space<vmem>>, vector<1x1x32x1xf32>
    %59 = vector.shape_cast %58 : vector<1x1x32x1xf32> to vector<32x1xf32>
    %60 = vector.broadcast %59 : vector<32x1xf32> to vector<32x128xf32>
    %61 = arith.addf %57, %60 : vector<32x128xf32>
    %62 = arith.addf %43, %61 : vector<32x128xf32>
    %63 = math.tanh %62 : vector<32x128xf32>
    %c0_57 = arith.constant 0 : index
    %c0_58 = arith.constant 0 : index
    %64 = vector.load %arg6[%c0_57, %c0_58] : memref<2x32xf32, #tpu.memory_space<vmem>>, vector<2x32xf32>
    %cst_59 = arith.constant dense<0.000000e+00> : vector<2x128xf32>
    %65 = tpu.matmul %64, %63, %cst_59 {dimension_numbers = #tpu.dot_dimension_numbers<[1], [0], [0], [1], [0, 0, 1, 1], [], []>} : vector<2x32xf32>, vector<32x128xf32>, vector<2x128xf32> -> vector<2x128xf32>
    %c0_60 = arith.constant 0 : index
    %c0_61 = arith.constant 0 : index
    %66 = vector.load %arg7[%c0_60, %c0_61] : memref<2x1xf32, #tpu.memory_space<vmem>>, vector<2x1xf32>
    %67 = vector.broadcast %66 : vector<2x1xf32> to vector<2x128xf32>
    %68 = arith.addf %65, %67 : vector<2x128xf32>
    %c0_62 = arith.constant 0 : index
    %c0_63 = arith.constant 0 : index
    %69 = vector.load %arg8[%c0_62, %c0_63] : memref<2x128xf32, #tpu.memory_space<vmem>>, vector<2x128xf32>
    tpu.vector_store %arg8[%c0_62, %c0_63], %68 {strides = array<i32>} : memref<2x128xf32, #tpu.memory_space<vmem>>, vector<2x128xf32>,
    return
  }
  func.func @transform_0(%arg0: i32) -> (i32, i32) {
    %c0_i32 = arith.constant 0 : i32
    %c0_i32_0 = arith.constant 0 : i32
    return %c0_i32, %arg0 : i32, i32
  }
  func.func @transform_1(%arg0: i32) -> (i32, i32) {
    %c0_i32 = arith.constant 0 : i32
    %c0_i32_0 = arith.constant 0 : i32
    %c0_i32_1 = arith.constant 0 : i32
    return %c0_i32, %c0_i32_0 : i32, i32
  }
  func.func @transform_2(%arg0: i32) -> (i32, i32) {
    %c0_i32 = arith.constant 0 : i32
    %c0_i32_0 = arith.constant 0 : i32
    %c0_i32_1 = arith.constant 0 : i32
    return %c0_i32, %c0_i32_0 : i32, i32
  }
  func.func @transform_3(%arg0: i32) -> (i32, i32, i32, i32) {
    %c0_i32 = arith.constant 0 : i32
    %c0_i32_0 = arith.constant 0 : i32
    %c0_i32_1 = arith.constant 0 : i32
    %c0_i32_2 = arith.constant 0 : i32
    %c0_i32_3 = arith.constant 0 : i32
    return %c0_i32, %c0_i32_0, %c0_i32_1, %c0_i32_2 : i32, i32, i32, i32
  }
  func.func @transform_4(%arg0: i32) -> (i32, i32, i32, i32) {
    %c0_i32 = arith.constant 0 : i32
    %c0_i32_0 = arith.constant 0 : i32
    %c0_i32_1 = arith.constant 0 : i32
    %c0_i32_2 = arith.constant 0 : i32
    %c0_i32_3 = arith.constant 0 : i32
    return %c0_i32, %c0_i32_0, %c0_i32_1, %c0_i32_2 : i32, i32, i32, i32
  }
  func.func @transform_5(%arg0: i32) -> (i32, i32) {
    %c0_i32 = arith.constant 0 : i32
    %c0_i32_0 = arith.constant 0 : i32
    %c0_i32_1 = arith.constant 0 : i32
    return %c0_i32, %c0_i32_0 : i32, i32
  }
  func.func @transform_6(%arg0: i32) -> (i32, i32) {
    %c0_i32 = arith.constant 0 : i32
    %c0_i32_0 = arith.constant 0 : i32
    %c0_i32_1 = arith.constant 0 : i32
    return %c0_i32, %c0_i32_0 : i32, i32
  }
  func.func @transform_7(%arg0: i32) -> (i32, i32) {
    %c0_i32 = arith.constant 0 : i32
    %c0_i32_0 = arith.constant 0 : i32
    return %c0_i32, %arg0 : i32, i32
  }
}

</mosaic_0001>

<llo_original>
// kernel: tpu_custom_call.1
$region0: #{tpu_custom_call.1}
  #allocation0 [shape = 'u32[]', space=smem, size = 0x4, offset = 0x4, fixed_abs, tag = 'smem constant byte address 0x4 - core index']
  #allocation1 [shape = 'u32[72,128]{1,0:T(1,128)}', space=vmem, size = 0x9000, scoped, tag = 'internal scratch']
  %s0 = inlined_call_operand.vmem [shape: f32[2,256], index: 0, kind: input, shape index: {}]
  %s1 = inlined_call_operand.vmem [shape: f32[32,2], index: 1, kind: input, shape index: {}]
  %s2 = inlined_call_operand.vmem [shape: f32[32,1], index: 2, kind: input, shape index: {}]
  %s3 = inlined_call_operand.vmem [shape: bf16[3,2,32,32], index: 3, kind: input, shape index: {}]
  %s4 = inlined_call_operand.vmem [shape: f32[3,2,32,1], index: 4, kind: input, shape index: {}]
  %s5 = inlined_call_operand.vmem [shape: f32[2,32], index: 5, kind: input, shape index: {}]
  %s6 = inlined_call_operand.vmem [shape: f32[2,1], index: 6, kind: input, shape index: {}]
  %s7 = inlined_call_operand.hbm [shape: f32[2,256], index: 7, kind: output, shape index: {}]
  %s8 = sld [smem:[#allocation0]]
  $region61: #{tpu_custom_call.1} parent=0
    _
  %s10 = ssub.s32 1, %s8
  %s11 = scalar_select 0, %s10, %s8
  $region1: #{tpu_custom_call.1} parent=0
    #allocation2 [shape = 'u8[2048]{0}', space=vmem, size = 0x800, scoped, tag = 'output window, operand 0']
    #allocation3 [shape = 's32[2]{0}', space=sflag, size = 0x8, scoped, tag = 'scoped memory for tpu_custom_call.1']
    %12 = vsyncpa [#allocation3], 0
    %s13 = scalar_lea.sflag [#allocation3], 1
    %14 = vsyncpa %s13, 0
    loop: start=0, step=1, limit=4
    $region2: #{tpu_custom_call.1} parent=1 // loop_pre_header
      _
    $region3: #{tpu_custom_call.1} parent=1 // loop_header
      %s16 = sphi 0, %s20
      %p17 = scmp.ge.s32.totalorder %s16, 4
      %s26 = sphi 0, %s28
      %s29 = sphi 0, %s26
      %s30 = sphi 0, %s29
      %s46 = sphi 0, %s30
      %s50 = sphi 0, %s50
      %s52 = sphi 0, %s50
      %s53 = sphi 0, %s52
      %s67 = sphi 0, %s53
      %s71 = sphi 0, %s71
      %s73 = sphi 0, %s71
      %s74 = sphi 0, %s73
      %s88 = sphi 0, %s74
      %s92 = sphi 0, %s92
      %s94 = sphi 0, %s92
      %s95 = sphi 0, %s94
      %s109 = sphi 0, %s95
      %s113 = sphi 0, %s113
      %s115 = sphi 0, %s113
      %s116 = sphi 0, %s115
      %s130 = sphi 0, %s116
      %s134 = sphi 0, %s134
      %s136 = sphi 0, %s134
      %s137 = sphi 0, %s136
      %s151 = sphi 0, %s137
      %s155 = sphi 0, %s155
      %s157 = sphi 0, %s155
      %s158 = sphi 0, %s157
      %s172 = sphi 0, %s158
      %s178 = sphi 0, %s180
      %s181 = sphi 0, %s178
      %s182 = sphi 0, %s181
      %s198 = sphi 0, %s182
    $region4: #{tpu_custom_call.1} parent=1 // loop_header_branch
      %19 = sbr.rel (%p17) target = $region8
    $region5: #{tpu_custom_call.1} parent=1 // loop_body
      %s21 = ssub.s32 %s16, 1
      %s22 = ssub.s32 %s16, 2
      %s23 = sadd.s32 %s16, 1
      %s24 = ssub.s32 %s16, %s23
      %p25 = scmp.eq.s32.totalorder %s24, 0
      %s27 = sadd.s32 %s26, 1
      %s28 = scalar_select %p25, %s26, %s27
      %p31 = pneg %p25
      %p32 = scmp.eq.s32.totalorder %s16, 1
      %p33 = por %p31, %p32
      %p34 = scmp.ne.s32.totalorder %s26, %s29
      %p35 = scmp.eq.s32.totalorder %s16, 0
      %p36 = por %p34, %p35
      %p37 = scmp.ne.s32.totalorder %s26, %s29
      %p38 = scmp.eq.s32.totalorder %s21, 1
      %p39 = por %p37, %p38
      %p40 = scmp.ne.s32.totalorder %s29, %s30
      %p41 = scmp.eq.s32.totalorder %s21, 0
      %p42 = por %p40, %p41
      %p43 = scmp.ne.s32.totalorder %s29, %s30
      %p44 = scmp.eq.s32.totalorder %s22, 1
      %p45 = por %p43, %p44
      %p47 = scmp.ne.s32.totalorder %s30, %s46
      %p48 = scmp.eq.s32.totalorder %s22, 0
      %p49 = por %p47, %p48
      %s51 = sadd.s32 %s50, 1
      %p54 = scmp.eq.s32.totalorder %s16, 1
      %p55 = scmp.ne.s32.totalorder %s50, %s52
      %p56 = scmp.eq.s32.totalorder %s16, 0
      %p57 = por %p55, %p56
      %p58 = scmp.ne.s32.totalorder %s50, %s52
      %p59 = scmp.eq.s32.totalorder %s21, 1
      %p60 = por %p58, %p59
      %p61 = scmp.ne.s32.totalorder %s52, %s53
      %p62 = scmp.eq.s32.totalorder %s21, 0
      %p63 = por %p61, %p62
      %p64 = scmp.ne.s32.totalorder %s52, %s53
      %p65 = scmp.eq.s32.totalorder %s22, 1
      %p66 = por %p64, %p65
      %p68 = scmp.ne.s32.totalorder %s53, %s67
      %p69 = scmp.eq.s32.totalorder %s22, 0
      %p70 = por %p68, %p69
      %s72 = sadd.s32 %s71, 1
      %p75 = scmp.eq.s32.totalorder %s16, 1
      %p76 = scmp.ne.s32.totalorder %s71, %s73
      %p77 = scmp.eq.s32.totalorder %s16, 0
      %p78 = por %p76, %p77
      %p79 = scmp.ne.s32.totalorder %s71, %s73
      %p80 = scmp.eq.s32.totalorder %s21, 1
      %p81 = por %p79, %p80
      %p82 = scmp.ne.s32.totalorder %s73, %s74
      %p83 = scmp.eq.s32.totalorder %s21, 0
      %p84 = por %p82, %p83
      %p85 = scmp.ne.s32.totalorder %s73, %s74
      %p86 = scmp.eq.s32.totalorder %s22, 1
      %p87 = por %p85, %p86
      %p89 = scmp.ne.s32.totalorder %s74, %s88
      %p90 = scmp.eq.s32.totalorder %s22, 0
      %p91 = por %p89, %p90
      %s93 = sadd.s32 %s92, 1
      %p96 = scmp.eq.s32.totalorder %s16, 1
      %p97 = scmp.ne.s32.totalorder %s92, %s94
      %p98 = scmp.eq.s32.totalorder %s16, 0
      %p99 = por %p97, %p98
      %p100 = scmp.ne.s32.totalorder %s92, %s94
      %p101 = scmp.eq.s32.totalorder %s21, 1
      %p102 = por %p100, %p101
      %p103 = scmp.ne.s32.totalorder %s94, %s95
      %p104 = scmp.eq.s32.totalorder %s21, 0
      %p105 = por %p103, %p104
      %p106 = scmp.ne.s32.totalorder %s94, %s95
      %p107 = scmp.eq.s32.totalorder %s22, 1
      %p108 = por %p106, %p107
      %p110 = scmp.ne.s32.totalorder %s95, %s109
      %p111 = scmp.eq.s32.totalorder %s22, 0
      %p112 = por %p110, %p111
      %s114 = sadd.s32 %s113, 1
      %p117 = scmp.eq.s32.totalorder %s16, 1
      %p118 = scmp.ne.s32.totalorder %s113, %s115
      %p119 = scmp.eq.s32.totalorder %s16, 0
      %p120 = por %p118, %p119
      %p121 = scmp.ne.s32.totalorder %s113, %s115
      %p122 = scmp.eq.s32.totalorder %s21, 1
      %p123 = por %p121, %p122
      %p124 = scmp.ne.s32.totalorder %s115, %s116
      %p125 = scmp.eq.s32.totalorder %s21, 0
      %p126 = por %p124, %p125
      %p127 = scmp.ne.s32.totalorder %s115, %s116
      %p128 = scmp.eq.s32.totalorder %s22, 1
      %p129 = por %p127, %p128
      %p131 = scmp.ne.s32.totalorder %s116, %s130
      %p132 = scmp.eq.s32.totalorder %s22, 0
      %p133 = por %p131, %p132
      %s135 = sadd.s32 %s134, 1
      %p138 = scmp.eq.s32.totalorder %s16, 1
      %p139 = scmp.ne.s32.totalorder %s134, %s136
      %p140 = scmp.eq.s32.totalorder %s16, 0
      %p141 = por %p139, %p140
      %p142 = scmp.ne.s32.totalorder %s134, %s136
      %p143 = scmp.eq.s32.totalorder %s21, 1
      %p144 = por %p142, %p143
      %p145 = scmp.ne.s32.totalorder %s136, %s137
      %p146 = scmp.eq.s32.totalorder %s21, 0
      %p147 = por %p145, %p146
      %p148 = scmp.ne.s32.totalorder %s136, %s137
      %p149 = scmp.eq.s32.totalorder %s22, 1
      %p150 = por %p148, %p149
      %p152 = scmp.ne.s32.totalorder %s137, %s151
      %p153 = scmp.eq.s32.totalorder %s22, 0
      %p154 = por %p152, %p153
      %s156 = sadd.s32 %s155, 1
      %p159 = scmp.eq.s32.totalorder %s16, 1
      %p160 = scmp.ne.s32.totalorder %s155, %s157
      %p161 = scmp.eq.s32.totalorder %s16, 0
      %p162 = por %p160, %p161
      %p163 = scmp.ne.s32.totalorder %s155, %s157
      %p164 = scmp.eq.s32.totalorder %s21, 1
      %p165 = por %p163, %p164
      %p166 = scmp.ne.s32.totalorder %s157, %s158
      %p167 = scmp.eq.s32.totalorder %s21, 0
      %p168 = por %p166, %p167
      %p169 = scmp.ne.s32.totalorder %s157, %s158
      %p170 = scmp.eq.s32.totalorder %s22, 1
      %p171 = por %p169, %p170
      %p173 = scmp.ne.s32.totalorder %s158, %s172
      %p174 = scmp.eq.s32.totalorder %s22, 0
      %p175 = por %p173, %p174
      %s176 = ssub.s32 %s16, %s23
      %p177 = scmp.eq.s32.totalorder %s176, 0
      %s179 = sadd.s32 %s178, 1
      %s180 = scalar_select %p177, %s178, %s179
      %p183 = pneg %p177
      %p184 = scmp.eq.s32.totalorder %s16, 1
      %p185 = por %p183, %p184
      %p186 = scmp.ne.s32.totalorder %s178, %s181
      %p187 = scmp.eq.s32.totalorder %s16, 0
      %p188 = por %p186, %p187
      %p189 = scmp.ne.s32.totalorder %s178, %s181
      %p190 = scmp.eq.s32.totalorder %s21, 1
      %p191 = por %p189, %p190
      %p192 = scmp.ne.s32.totalorder %s181, %s182
      %p193 = scmp.eq.s32.totalorder %s21, 0
      %p194 = por %p192, %p193
      %p195 = scmp.ne.s32.totalorder %s181, %s182
      %p196 = scmp.eq.s32.totalorder %s22, 1
      %p197 = por %p195, %p196
      %p199 = scmp.ne.s32.totalorder %s182, %s198
      %p200 = scmp.eq.s32.totalorder %s22, 0
      %p201 = por %p199, %p200
      %p202 = scmp.le.s32.totalorder 1, %s16
      %p203 = scmp.lt.s32.totalorder %s16, 3
      %p204 = pnand %p202, %p203
      %p205 = pneg %p204
      // Predicated region
      $region9: #{tpu_custom_call.1} parent=5 // pred_check
        _
      $region10: #{tpu_custom_call.1} parent=5 // pred_check_branch
        %207 = sbr.rel (%p204) target = $region12
      $region11: #{tpu_custom_call.1} parent=5 // pred_region
        %s208 = ssub.s32 %s16, 1
        // Predicated region
        $region13: #{tpu_custom_call.1} parent=11 // pred_check
          %p209 = pneg %p63
        $region14: #{tpu_custom_call.1} parent=11 // pred_check_branch
          %211 = sbr.rel (%p209) target = $region16
        $region15: #{tpu_custom_call.1} parent=11 // pred_region
          _
        $region16: #{tpu_custom_call.1} parent=11 // pred_fallthru
          _
        // Predicated region
        $region17: #{tpu_custom_call.1} parent=11 // pred_check
          %p212 = pneg %p84
        $region18: #{tpu_custom_call.1} parent=11 // pred_check_branch
          %214 = sbr.rel (%p212) target = $region20
        $region19: #{tpu_custom_call.1} parent=11 // pred_region
          _
        $region20: #{tpu_custom_call.1} parent=11 // pred_fallthru
          _
        // Predicated region
        $region21: #{tpu_custom_call.1} parent=11 // pred_check
          %p215 = pneg %p105
        $region22: #{tpu_custom_call.1} parent=11 // pred_check_branch
          %217 = sbr.rel (%p215) target = $region24
        $region23: #{tpu_custom_call.1} parent=11 // pred_region
          _
        $region24: #{tpu_custom_call.1} parent=11 // pred_fallthru
          _
        // Predicated region
        $region25: #{tpu_custom_call.1} parent=11 // pred_check
          %p218 = pneg %p126
        $region26: #{tpu_custom_call.1} parent=11 // pred_check_branch
          %220 = sbr.rel (%p218) target = $region28
        $region27: #{tpu_custom_call.1} parent=11 // pred_region
          _
        $region28: #{tpu_custom_call.1} parent=11 // pred_fallthru
          _
        // Predicated region
        $region29: #{tpu_custom_call.1} parent=11 // pred_check
          %p221 = pneg %p147
        $region30: #{tpu_custom_call.1} parent=11 // pred_check_branch
          %223 = sbr.rel (%p221) target = $region32
        $region31: #{tpu_custom_call.1} parent=11 // pred_region
          _
        $region32: #{tpu_custom_call.1} parent=11 // pred_fallthru
          _
        // Predicated region
        $region33: #{tpu_custom_call.1} parent=11 // pred_check
          %p224 = pneg %p168
        $region34: #{tpu_custom_call.1} parent=11 // pred_check_branch
          %226 = sbr.rel (%p224) target = $region36
        $region35: #{tpu_custom_call.1} parent=11 // pred_region
          _
        $region36: #{tpu_custom_call.1} parent=11 // pred_fallthru
          _
      $region12: #{tpu_custom_call.1} parent=5 // pred_fallthru
        _
      %p227 = scmp.lt.s32.totalorder %s16, 2
      // Predicated region
      $region37: #{tpu_custom_call.1} parent=5 // pred_check
        %p228 = pneg %p227
      $region38: #{tpu_custom_call.1} parent=5 // pred_check_branch
        %230 = sbr.rel (%p228) target = $region40
      $region39: #{tpu_custom_call.1} parent=5 // pred_region
        // Predicated region
        $region41: #{tpu_custom_call.1} parent=39 // pred_check
          %p231 = pneg %p36
        $region42: #{tpu_custom_call.1} parent=39 // pred_check_branch
          %233 = sbr.rel (%p231) target = $region44
        $region43: #{tpu_custom_call.1} parent=39 // pred_region
          %p234 = scmp.lt.s32.totalorder %s16, 1
          %s235 = scalar_select %p234, %s16, 1
          %s236 = smul.addr %s235, 2
          %s237 = scalar_lea.vmem %s0, %s236
        $region44: #{tpu_custom_call.1} parent=39 // pred_fallthru
          _
      $region40: #{tpu_custom_call.1} parent=5 // pred_fallthru
        _
      %p238 = scmp.le.s32.totalorder 1, %s16
      %p239 = scmp.lt.s32.totalorder %s16, 3
      %p240 = pnand %p238, %p239
      %p241 = pneg %p240
      // Predicated region
      $region45: #{tpu_custom_call.1} parent=5 // pred_check
        _
      $region46: #{tpu_custom_call.1} parent=5 // pred_check_branch
        %243 = sbr.rel (%p240) target = $region48
      $region47: #{tpu_custom_call.1} parent=5 // pred_region
        %s244 = ssub.s32 %s16, 1
        %p245 = scmp.lt.s32.totalorder %s21, 1
        %s246 = scalar_select %p245, %s21, 1
        %s247 = smul.addr %s246, 2
        %s248 = scalar_lea.vmem %s0, %s247
        %p249 = pneg %p42
        %p250 = pneg %p39
        %p251 = pneg %p63
        %p252 = pneg %p60
        %p253 = pneg %p84
        %p254 = pneg %p81
        %p255 = pneg %p105
        %p256 = pneg %p102
        %p257 = pneg %p126
        %p258 = pneg %p123
        %p259 = pneg %p147
        %p260 = pneg %p144
        %p261 = pneg %p168
        %p262 = pneg %p165
        %p263 = pneg %p194
        %p264 = pneg %p191
        %s265 = sand.u32 %s181, 1
        %s266 = scalar_lea.sflag [#allocation3], %s265
        %s267 = sand.u32 %s181, 1
        %s268 = smul.addr %s267, 2
        %s269 = scalar_lea.vmem [#allocation2], %s268
        %p270 = scmp.lt.s32.totalorder %s21, 1
        %s271 = scalar_select %p270, %s21, 1
        %s272 = smul.addr %s271, 2
        %s273 = scalar_lea.vmem %s0, %s272
        %v275 = vld [vmem:[%s1] sm:$0xff]
        %v276 = vld [vmem:[%s1 + $0x8] sm:$0xff]
        %v277 = vld [vmem:[%s1 + $0x10] sm:$0xff]
        %v278 = vld [vmem:[%s1 + $0x18] sm:$0xff]
        %v279 = vld [vmem:[%s273] sm:$0x3]
        %v280 = vld [vmem:[%s2] sm:$0xff]
        %v281 = vld [vmem:[%s2 + $0x8] sm:$0xff]
        %v282 = vld [vmem:[%s2 + $0x10] sm:$0xff]
        %v283 = vld [vmem:[%s2 + $0x18] sm:$0xff]
        %285 = vset.pattern.permute.xlu0 0
        %286 = vperm.xlu0 %285, %v280
        %v287 = vpop.permute.xlu0 %286
        %290 = vset.pattern.permute.xlu0 0
        %291 = vperm.xlu0 %290, %v281
        %v292 = vpop.permute.xlu0 %291
        %295 = vset.pattern.permute.xlu0 0
        %296 = vperm.xlu0 %295, %v282
        %v297 = vpop.permute.xlu0 %296
        %300 = vset.pattern.permute.xlu0 0
        %301 = vperm.xlu0 %300, %v283
        %v302 = vpop.permute.xlu0 %301
        %vm304 = vcmask 15360
        %v306 = vsel %vm304, %v275, 0
        %v309 = vsel %vm304, %v276, 0
        %v312 = vsel %vm304, %v277, 0
        %v315 = vsel %vm304, %v278, 0
        %vm317 = vcmask 1041408
        %v319 = vsel %vm317, %v279, 0
        %321 = vmatpush.msra.mxu0 0.0
        %322 = vmatpush.msra.mxu0 0.0
        %323 = vmatpush.msra.mxu0 0.0
        %324 = vmatpush.msra.mxu0 0.0
        %325 = vmatpush.msra.mxu0 0.0
        %326 = vmatpush.msra.mxu0 0.0
        %327 = vmatpush.msra.mxu0 0.0
        %328 = vmatpush.msra.mxu0 0.0
        %329 = vmatpush.msra.mxu0 0.0
        %330 = vmatpush.msra.mxu0 0.0
        %331 = vmatpush.msra.mxu0 0.0
        %332 = vmatpush.msra.mxu0 0.0
        %333 = vmatpush.msra.mxu0 0.0
        %334 = vmatpush.msra.mxu0 0.0
        %335 = vmatpush.msra.mxu0 0.0
        %336 = vmatpush.msra.mxu0 %v319
        %337 = vmatmul.f32.gmra.mxu0 %v306
        %v338 = vpop.f32.mrf.mxu0
        %v339 = vadd.f32 %v287, %v338
        %340 = vmatmul.f32.gmra.mxu0 %v309
        %v341 = vpop.f32.mrf.mxu0
        %v342 = vadd.f32 %v292, %v341
        %343 = vmatmul.f32.gmra.mxu0 %v312
        %v344 = vpop.f32.mrf.mxu0
        %v345 = vadd.f32 %v297, %v344
        %346 = vmatmul.f32.gmra.mxu0 %v315
        %v347 = vpop.f32.mrf.mxu0
        %v348 = vadd.f32 %v302, %v347
        %349 = vdwg.mxu0
        %v350 = vtanh.pop %v339
        %v351 = vtanh.pop %v342
        %v352 = vtanh.pop %v345
        %v353 = vtanh.pop %v348
        %v354 = vpack.c.bf16 %v351, %v350
        %v355 = vpack.c.bf16 %v353, %v352
        %v356 = vld [vmem:[%s3] sm:$0xf]
        %v357 = vld [vmem:[%s3 + $0x4] sm:$0xf]
        %v358 = vld [vmem:[%s3 + $0x8] sm:$0xf]
        %v359 = vld [vmem:[%s3 + $0xc] sm:$0xf]
        %v360 = vld [vmem:[%s4] sm:$0xff]
        %v361 = vld [vmem:[%s4 + $0x8] sm:$0xff]
        %v362 = vld [vmem:[%s4 + $0x10] sm:$0xff]
        %v363 = vld [vmem:[%s4 + $0x18] sm:$0xff]
        %365 = vset.pattern.permute.xlu0 0
        %366 = vperm.xlu0 %365, %v360
        %v367 = vpop.permute.xlu0 %366
        %370 = vset.pattern.permute.xlu0 0
        %371 = vperm.xlu0 %370, %v361
        %v372 = vpop.permute.xlu0 %371
        %375 = vset.pattern.permute.xlu0 0
        %376 = vperm.xlu0 %375, %v362
        %v377 = vpop.permute.xlu0 %376
        %380 = vset.pattern.permute.xlu0 0
        %381 = vperm.xlu0 %380, %v363
        %v382 = vpop.permute.xlu0 %381
        %v388 = vunpack.c.l.b16 %v356
        %v389 = vunpack.c.l.b16 %v357
        %v390 = vunpack.c.l.b16 %v358
        %v391 = vunpack.c.l.b16 %v359
        %v392 = vpack.c.b16 %v389, %v388
        %v393 = vpack.c.b16 %v391, %v390
        %vm394 = vcmask 261120
        %v396 = vsel %vm394, %v392, 0
        %v399 = vsel %vm394, %v393, 0
        %401 = vmatpush.bf16.msra.mxu0 0
        %402 = vmatpush.bf16.msra.mxu0 0
        %403 = vmatpush.bf16.msra.mxu0 0
        %404 = vmatpush.bf16.msra.mxu0 0
        %405 = vmatpush.bf16.msra.mxu0 0
        %406 = vmatpush.bf16.msra.mxu0 0
        %407 = vmatpush.bf16.msra.mxu0 %v355
        %408 = vmatpush.bf16.msra.mxu0 %v354
        %409 = vmatmul.bf16.gmra.mxu0 %v396
        %v410 = vpop.f32.mrf.mxu0
        %v411 = vadd.f32 %v367, %v410
        %v412 = vpop.f32.mrf.mxu0
        %v413 = vadd.f32 %v372, %v412
        %414 = vmatmul.bf16.gmra.mxu0 %v399
        %v415 = vpop.f32.mrf.mxu0
        %v416 = vadd.f32 %v377, %v415
        %v417 = vpop.f32.mrf.mxu0
        %v418 = vadd.f32 %v382, %v417
        %419 = vdwg.mxu0
        %v420 = vtanh.pop %v411
        %v421 = vtanh.pop %v413
        %v422 = vtanh.pop %v416
        %v423 = vtanh.pop %v418
        %v424 = vpack.c.bf16 %v421, %v420
        %v425 = vpack.c.bf16 %v423, %v422
        %s426 = scalar_lea.vmem %s3, 16
        %v427 = vld [vmem:[%s426] sm:$0xf]
        %v428 = vld [vmem:[%s426 + $0x4] sm:$0xf]
        %v429 = vld [vmem:[%s426 + $0x8] sm:$0xf]
        %v430 = vld [vmem:[%s426 + $0xc] sm:$0xf]
        %s431 = scalar_lea.vmem %s4, 32
        %v432 = vld [vmem:[%s431] sm:$0xff]
        %v433 = vld [vmem:[%s431 + $0x8] sm:$0xff]
        %v434 = vld [vmem:[%s431 + $0x10] sm:$0xff]
        %v435 = vld [vmem:[%s431 + $0x18] sm:$0xff]
        %437 = vset.pattern.permute.xlu0 0
        %438 = vperm.xlu0 %437, %v432
        %v439 = vpop.permute.xlu0 %438
        %442 = vset.pattern.permute.xlu0 0
        %443 = vperm.xlu0 %442, %v433
        %v444 = vpop.permute.xlu0 %443
        %447 = vset.pattern.permute.xlu0 0
        %448 = vperm.xlu0 %447, %v434
        %v449 = vpop.permute.xlu0 %448
        %452 = vset.pattern.permute.xlu0 0
        %453 = vperm.xlu0 %452, %v435
        %v454 = vpop.permute.xlu0 %453
        %v460 = vunpack.c.l.b16 %v427
        %v461 = vunpack.c.l.b16 %v428
        %v462 = vunpack.c.l.b16 %v429
        %v463 = vunpack.c.l.b16 %v430
        %v464 = vpack.c.b16 %v461, %v460
        %v465 = vpack.c.b16 %v463, %v462
        %v467 = vsel %vm394, %v464, 0
        %v470 = vsel %vm394, %v465, 0
        %472 = vmatpush.bf16.msra.mxu0 0
        %473 = vmatpush.bf16.msra.mxu0 0
        %474 = vmatpush.bf16.msra.mxu0 0
        %475 = vmatpush.bf16.msra.mxu0 0
        %476 = vmatpush.bf16.msra.mxu0 0
        %477 = vmatpush.bf16.msra.mxu0 0
        %478 = vmatpush.bf16.msra.mxu0 %v425
        %479 = vmatpush.bf16.msra.mxu0 %v424
        %480 = vmatmul.bf16.gmra.mxu0 %v467
        %v481 = vpop.f32.mrf.mxu0
        %v482 = vadd.f32 %v439, %v481
        %v483 = vpop.f32.mrf.mxu0
        %v484 = vadd.f32 %v444, %v483
        %485 = vmatmul.bf16.gmra.mxu0 %v470
        %v486 = vpop.f32.mrf.mxu0
        %v487 = vadd.f32 %v449, %v486
        %v488 = vpop.f32.mrf.mxu0
        %v489 = vadd.f32 %v454, %v488
        %490 = vdwg.mxu0
        %v491 = vadd.f32 %v339, %v482
        %v492 = vadd.f32 %v342, %v484
        %v493 = vadd.f32 %v345, %v487
        %v494 = vadd.f32 %v348, %v489
        %v495 = vtanh.pop %v491
        %v496 = vtanh.pop %v492
        %v497 = vtanh.pop %v493
        %v498 = vtanh.pop %v494
        %v499 = vpack.c.bf16 %v496, %v495
        %v500 = vpack.c.bf16 %v498, %v497
        %s501 = scalar_lea.vmem %s3, 32
        %v502 = vld [vmem:[%s501] sm:$0xf]
        %v503 = vld [vmem:[%s501 + $0x4] sm:$0xf]
        %v504 = vld [vmem:[%s501 + $0x8] sm:$0xf]
        %v505 = vld [vmem:[%s501 + $0xc] sm:$0xf]
        %s506 = scalar_lea.vmem %s4, 64
        %v507 = vld [vmem:[%s506] sm:$0xff]
        %v508 = vld [vmem:[%s506 + $0x8] sm:$0xff]
        %v509 = vld [vmem:[%s506 + $0x10] sm:$0xff]
        %v510 = vld [vmem:[%s506 + $0x18] sm:$0xff]
        %512 = vset.pattern.permute.xlu0 0
        %513 = vperm.xlu0 %512, %v507
        %v514 = vpop.permute.xlu0 %513
        %517 = vset.pattern.permute.xlu0 0
        %518 = vperm.xlu0 %517, %v508
        %v519 = vpop.permute.xlu0 %518
        %522 = vset.pattern.permute.xlu0 0
        %523 = vperm.xlu0 %522, %v509
        %v524 = vpop.permute.xlu0 %523
        %527 = vset.pattern.permute.xlu0 0
        %528 = vperm.xlu0 %527, %v510
        %v529 = vpop.permute.xlu0 %528
        %v535 = vunpack.c.l.b16 %v502
        %v536 = vunpack.c.l.b16 %v503
        %v537 = vunpack.c.l.b16 %v504
        %v538 = vunpack.c.l.b16 %v505
        %v539 = vpack.c.b16 %v536, %v535
        %v540 = vpack.c.b16 %v538, %v537
        %v542 = vsel %vm394, %v539, 0
        %v545 = vsel %vm394, %v540, 0
        %547 = vmatpush.bf16.msra.mxu0 0
        %548 = vmatpush.bf16.msra.mxu0 0
        %549 = vmatpush.bf16.msra.mxu0 0
        %550 = vmatpush.bf16.msra.mxu0 0
        %551 = vmatpush.bf16.msra.mxu0 0
        %552 = vmatpush.bf16.msra.mxu0 0
        %553 = vmatpush.bf16.msra.mxu0 %v500
        %554 = vmatpush.bf16.msra.mxu0 %v499
        %555 = vmatmul.bf16.gmra.mxu0 %v542
        %v556 = vpop.f32.mrf.mxu0
        %v557 = vadd.f32 %v514, %v556
        %v558 = vpop.f32.mrf.mxu0
        %v559 = vadd.f32 %v519, %v558
        %560 = vmatmul.bf16.gmra.mxu0 %v545
        %v561 = vpop.f32.mrf.mxu0
        %v562 = vadd.f32 %v524, %v561
        %v563 = vpop.f32.mrf.mxu0
        %v564 = vadd.f32 %v529, %v563
        %565 = vdwg.mxu0
        %v566 = vtanh.pop %v557
        %v567 = vtanh.pop %v559
        %v568 = vtanh.pop %v562
        %v569 = vtanh.pop %v564
        %v570 = vpack.c.bf16 %v567, %v566
        %v571 = vpack.c.bf16 %v569, %v568
        %s572 = scalar_lea.vmem %s3, 48
        %v573 = vld [vmem:[%s572] sm:$0xf]
        %v574 = vld [vmem:[%s572 + $0x4] sm:$0xf]
        %v575 = vld [vmem:[%s572 + $0x8] sm:$0xf]
        %v576 = vld [vmem:[%s572 + $0xc] sm:$0xf]
        %s577 = scalar_lea.vmem %s4, 96
        %v578 = vld [vmem:[%s577] sm:$0xff]
        %v579 = vld [vmem:[%s577 + $0x8] sm:$0xff]
        %v580 = vld [vmem:[%s577 + $0x10] sm:$0xff]
        %v581 = vld [vmem:[%s577 + $0x18] sm:$0xff]
        %583 = vset.pattern.permute.xlu0 0
        %584 = vperm.xlu0 %583, %v578
        %v585 = vpop.permute.xlu0 %584
        %588 = vset.pattern.permute.xlu0 0
        %589 = vperm.xlu0 %588, %v579
        %v590 = vpop.permute.xlu0 %589
        %593 = vset.pattern.permute.xlu0 0
        %594 = vperm.xlu0 %593, %v580
        %v595 = vpop.permute.xlu0 %594
        %598 = vset.pattern.permute.xlu0 0
        %599 = vperm.xlu0 %598, %v581
        %v600 = vpop.permute.xlu0 %599
        %v606 = vunpack.c.l.b16 %v573
        %v607 = vunpack.c.l.b16 %v574
        %v608 = vunpack.c.l.b16 %v575
        %v609 = vunpack.c.l.b16 %v576
        %v610 = vpack.c.b16 %v607, %v606
        %v611 = vpack.c.b16 %v609, %v608
        %v613 = vsel %vm394, %v610, 0
        %v616 = vsel %vm394, %v611, 0
        %618 = vmatpush.bf16.msra.mxu0 0
        %619 = vmatpush.bf16.msra.mxu0 0
        %620 = vmatpush.bf16.msra.mxu0 0
        %621 = vmatpush.bf16.msra.mxu0 0
        %622 = vmatpush.bf16.msra.mxu0 0
        %623 = vmatpush.bf16.msra.mxu0 0
        %624 = vmatpush.bf16.msra.mxu0 %v571
        %625 = vmatpush.bf16.msra.mxu0 %v570
        %626 = vmatmul.bf16.gmra.mxu0 %v613
        %v627 = vpop.f32.mrf.mxu0
        %v628 = vadd.f32 %v585, %v627
        %v629 = vpop.f32.mrf.mxu0
        %v630 = vadd.f32 %v590, %v629
        %631 = vmatmul.bf16.gmra.mxu0 %v616
        %v632 = vpop.f32.mrf.mxu0
        %v633 = vadd.f32 %v595, %v632
        %v634 = vpop.f32.mrf.mxu0
        %v635 = vadd.f32 %v600, %v634
        %636 = vdwg.mxu0
        %v637 = vadd.f32 %v491, %v628
        %v638 = vadd.f32 %v492, %v630
        %v639 = vadd.f32 %v493, %v633
        %v640 = vadd.f32 %v494, %v635
        %v641 = vtanh.pop %v637
        %v642 = vtanh.pop %v638
        %v643 = vtanh.pop %v639
        %v644 = vtanh.pop %v640
        %v645 = vpack.c.bf16 %v642, %v641
        %v646 = vpack.c.bf16 %v644, %v643
        %s647 = scalar_lea.vmem %s3, 64
        %v648 = vld [vmem:[%s647] sm:$0xf]
        %v649 = vld [vmem:[%s647 + $0x4] sm:$0xf]
        %v650 = vld [vmem:[%s647 + $0x8] sm:$0xf]
        %v651 = vld [vmem:[%s647 + $0xc] sm:$0xf]
        %s652 = scalar_lea.vmem %s4, 128
        %v653 = vld [vmem:[%s652] sm:$0xff]
        %v654 = vld [vmem:[%s652 + $0x8] sm:$0xff]
        %v655 = vld [vmem:[%s652 + $0x10] sm:$0xff]
        %v656 = vld [vmem:[%s652 + $0x18] sm:$0xff]
        %658 = vset.pattern.permute.xlu0 0
        %659 = vperm.xlu0 %658, %v653
        %v660 = vpop.permute.xlu0 %659
        %663 = vset.pattern.permute.xlu0 0
        %664 = vperm.xlu0 %663, %v654
        %v665 = vpop.permute.xlu0 %664
        %668 = vset.pattern.permute.xlu0 0
        %669 = vperm.xlu0 %668, %v655
        %v670 = vpop.permute.xlu0 %669
        %673 = vset.pattern.permute.xlu0 0
        %674 = vperm.xlu0 %673, %v656
        %v675 = vpop.permute.xlu0 %674
        %v681 = vunpack.c.l.b16 %v648
        %v682 = vunpack.c.l.b16 %v649
        %v683 = vunpack.c.l.b16 %v650
        %v684 = vunpack.c.l.b16 %v651
        %v685 = vpack.c.b16 %v682, %v681
        %v686 = vpack.c.b16 %v684, %v683
        %v688 = vsel %vm394, %v685, 0
        %v691 = vsel %vm394, %v686, 0
        %693 = vmatpush.bf16.msra.mxu0 0
        %694 = vmatpush.bf16.msra.mxu0 0
        %695 = vmatpush.bf16.msra.mxu0 0
        %696 = vmatpush.bf16.msra.mxu0 0
        %697 = vmatpush.bf16.msra.mxu0 0
        %698 = vmatpush.bf16.msra.mxu0 0
        %699 = vmatpush.bf16.msra.mxu0 %v646
        %700 = vmatpush.bf16.msra.mxu0 %v645
        %701 = vmatmul.bf16.gmra.mxu0 %v688
        %v702 = vpop.f32.mrf.mxu0
        %v703 = vadd.f32 %v660, %v702
        %v704 = vpop.f32.mrf.mxu0
        %v705 = vadd.f32 %v665, %v704
        %706 = vmatmul.bf16.gmra.mxu0 %v691
        %v707 = vpop.f32.mrf.mxu0
        %v708 = vadd.f32 %v670, %v707
        %v709 = vpop.f32.mrf.mxu0
        %v710 = vadd.f32 %v675, %v709
        %711 = vdwg.mxu0
        %v712 = vtanh.pop %v703
        %v713 = vtanh.pop %v705
        %v714 = vtanh.pop %v708
        %v715 = vtanh.pop %v710
        %v716 = vpack.c.bf16 %v713, %v712
        %v717 = vpack.c.bf16 %v715, %v714
        %s718 = scalar_lea.vmem %s3, 80
        %v719 = vld [vmem:[%s718] sm:$0xf]
        %v720 = vld [vmem:[%s718 + $0x4] sm:$0xf]
        %v721 = vld [vmem:[%s718 + $0x8] sm:$0xf]
        %v722 = vld [vmem:[%s718 + $0xc] sm:$0xf]
        %s723 = scalar_lea.vmem %s4, 160
        %v724 = vld [vmem:[%s723] sm:$0xff]
        %v725 = vld [vmem:[%s723 + $0x8] sm:$0xff]
        %v726 = vld [vmem:[%s723 + $0x10] sm:$0xff]
        %v727 = vld [vmem:[%s723 + $0x18] sm:$0xff]
        %729 = vset.pattern.permute.xlu0 0
        %730 = vperm.xlu0 %729, %v724
        %v731 = vpop.permute.xlu0 %730
        %734 = vset.pattern.permute.xlu0 0
        %735 = vperm.xlu0 %734, %v725
        %v736 = vpop.permute.xlu0 %735
        %739 = vset.pattern.permute.xlu0 0
        %740 = vperm.xlu0 %739, %v726
        %v741 = vpop.permute.xlu0 %740
        %744 = vset.pattern.permute.xlu0 0
        %745 = vperm.xlu0 %744, %v727
        %v746 = vpop.permute.xlu0 %745
        %v752 = vunpack.c.l.b16 %v719
        %v753 = vunpack.c.l.b16 %v720
        %v754 = vunpack.c.l.b16 %v721
        %v755 = vunpack.c.l.b16 %v722
        %v756 = vpack.c.b16 %v753, %v752
        %v757 = vpack.c.b16 %v755, %v754
        %v759 = vsel %vm394, %v756, 0
        %v762 = vsel %vm394, %v757, 0
        %764 = vmatpush.bf16.msra.mxu0 0
        %765 = vmatpush.bf16.msra.mxu0 0
        %766 = vmatpush.bf16.msra.mxu0 0
        %767 = vmatpush.bf16.msra.mxu0 0
        %768 = vmatpush.bf16.msra.mxu0 0
        %769 = vmatpush.bf16.msra.mxu0 0
        %770 = vmatpush.bf16.msra.mxu0 %v717
        %771 = vmatpush.bf16.msra.mxu0 %v716
        %772 = vmatmul.bf16.gmra.mxu0 %v759
        %v773 = vpop.f32.mrf.mxu0
        %v774 = vadd.f32 %v731, %v773
        %v775 = vpop.f32.mrf.mxu0
        %v776 = vadd.f32 %v736, %v775
        %777 = vmatmul.bf16.gmra.mxu0 %v762
        %v778 = vpop.f32.mrf.mxu0
        %v779 = vadd.f32 %v741, %v778
        %v780 = vpop.f32.mrf.mxu0
        %v781 = vadd.f32 %v746, %v780
        %782 = vdwg.mxu0
        %v783 = vadd.f32 %v637, %v774
        %v784 = vadd.f32 %v638, %v776
        %v785 = vadd.f32 %v639, %v779
        %v786 = vadd.f32 %v640, %v781
        %v787 = vtanh.pop %v783
        %v788 = vtanh.pop %v784
        %v789 = vtanh.pop %v785
        %v790 = vtanh.pop %v786
        %v791 = vld [vmem:[%s5] sm:$0x3]
        %v792 = vld [vmem:[%s6] sm:$0x3]
        %794 = vset.pattern.permute.xlu0 0
        %795 = vperm.xlu0 %794, %v792
        %v796 = vpop.permute.xlu0 %795
        %v799 = vsel %vm394, %v791, 0
        %801 = vmatpush.msra.mxu0 0.0
        %802 = vmatpush.msra.mxu0 0.0
        %803 = vmatpush.msra.mxu0 0.0
        %804 = vmatpush.msra.mxu0 0.0
        %805 = vmatpush.msra.mxu0 0.0
        %806 = vmatpush.msra.mxu0 0.0
        %807 = vmatpush.msra.mxu0 0.0
        %808 = vmatpush.msra.mxu0 0.0
        %809 = vmatpush.msra.mxu0 0.0
        %810 = vmatpush.msra.mxu0 0.0
        %811 = vmatpush.msra.mxu0 0.0
        %812 = vmatpush.msra.mxu0 0.0
        %813 = vmatpush.msra.mxu0 %v790
        %814 = vmatpush.msra.mxu0 %v789
        %815 = vmatpush.msra.mxu0 %v788
        %816 = vmatpush.msra.mxu0 %v787
        %817 = vmatmul.f32.gmra.mxu0 %v799
        %v818 = vpop.f32.mrf.mxu0
        %v819 = vadd.f32 %v796, %v818
        %820 = vdwg.mxu0
        %821 = vst [vmem:[%s269] sm:$0x3] %v819
        %s822 = sand.u32 %s181, 1
        %s823 = scalar_lea.sflag [#allocation3], %s822
        %s824 = sand.u32 %s181, 1
        %s825 = smul.addr %s824, 2
        %s826 = scalar_lea.vmem [#allocation2], %s825
        // Predicated region
        $region49: #{tpu_custom_call.1} parent=47 // pred_check
          %p827 = pneg %p191
        $region50: #{tpu_custom_call.1} parent=47 // pred_check_branch
          %829 = sbr.rel (%p827) target = $region52
        $region51: #{tpu_custom_call.1} parent=47 // pred_region
          %831 = vsyncadd %s823, 0
          %s832 = smul.addr %s21, 2
          %s833 = scalar_lea.hbm %s7, %s832
          %s835 = sshll.u32 %s826, 4
          %s836 = int_to_ptr.vmem [resolvable:$true] %s835
          %s837 = sshll.u32 %s833, 4
          %s838 = int_to_ptr.hbm [resolvable:$true] %s837
          %840 = dma.vmem_to_hbm [thread:$0]  %s836, 32, %s838, %s823
        $region52: #{tpu_custom_call.1} parent=47 // pred_fallthru
          _
      $region48: #{tpu_custom_call.1} parent=5 // pred_fallthru
        _
      %p841 = scmp.le.s32.totalorder 2, %s16
      // Predicated region
      $region53: #{tpu_custom_call.1} parent=5 // pred_check
        %p842 = pneg %p841
      $region54: #{tpu_custom_call.1} parent=5 // pred_check_branch
        %844 = sbr.rel (%p842) target = $region56
      $region55: #{tpu_custom_call.1} parent=5 // pred_region
        %s845 = ssub.s32 %s16, 2
        // Predicated region
        $region57: #{tpu_custom_call.1} parent=55 // pred_check
          %p846 = pneg %p197
        $region58: #{tpu_custom_call.1} parent=55 // pred_check_branch
          %848 = sbr.rel (%p846) target = $region60
        $region59: #{tpu_custom_call.1} parent=55 // pred_region
          %s849 = sand.u32 %s182, 1
          %s850 = scalar_lea.sflag [#allocation3], %s849
          %s851 = sand.u32 %s182, 1
          %s852 = smul.addr %s851, 2
          %s853 = scalar_lea.vmem [#allocation2], %s852
          %855 = dma.done %s850, 32
        $region60: #{tpu_custom_call.1} parent=55 // pred_fallthru
          _
      $region56: #{tpu_custom_call.1} parent=5 // pred_fallthru
        _
    $region6: #{tpu_custom_call.1} parent=1 // loop_footer
      %s20 = sadd.s32 1, %s16
    $region7: #{tpu_custom_call.1} parent=1 // loop_footer_branch
      %15 = sbr.rel target = $region3
    $region8: #{tpu_custom_call.1} parent=1 // loop_exit
      _
    %856 = vsyncpa [#allocation3], 1
    %s857 = scalar_lea.sflag [#allocation3], 1
    %858 = vsyncpa %s857, 1

</llo_original>
